<compile_context>
chip_gen: v5e
topology: v5e:2x2
jax: 0.10.0
libtpu: 0.0.40
codegen_flags: <defaults>
</compile_context>

<pallas_src>
import jax
import jax.numpy as jnp
from jax.experimental import pallas as pl
from jax.experimental.pallas import tpu as pltpu

LANE = 128
_MAX_TILE_ROWS = 4096


def _round_up(n, m):
    return ((n + m - 1) // m) * m


def _pad2(a, rows, cols):
    """Zero-pad a 2-D array up to (rows, cols), in f32."""
    a = jnp.asarray(a, jnp.float32)
    r, c = a.shape
    return jnp.pad(a, ((0, rows - r), (0, cols - c)))


def _num_tensorcores():
    """Best-effort TensorCore count per device (v7x has 2, v5e/v6e have 1)."""
    try:
        kind = (getattr(jax.devices()[0], "device_kind", "") or "").lower()
        if "v7" in kind:
            return 2
    except Exception:
        pass
    return 1


# ---------------------------------------------------------------------------
# Parameter prep (hoisted out of the jitted forward; run once per model).
# ---------------------------------------------------------------------------
def prepare_denoise_params(params, *, is_score=False, use_bf16=True):
    """Pad / split / downcast the (tiny) weights once.

    params: dict with 'w_in' (d_in, nunits), 'b_in' (1, nunits), 'w_mid'/'b_mid'
    lists, 'w_out' (nunits, nfeatures), 'b_out' (1, nfeatures).  Weights are
    stored (in, out) so y = x @ W + b.
    """
    compute_dtype = jnp.bfloat16 if use_bf16 else jnp.float32
    w_in = jnp.asarray(params["w_in"], jnp.float32)
    d_in, nunits = w_in.shape
    nfeatures = d_in if is_score else d_in - 1
    nfeat_out = params["w_out"].shape[1]
    H = _round_up(nunits, LANE)

    return dict(
        # inblock runs on the VPU as outer products -> keep these in f32.
        w_in_x=_pad2(w_in[:nfeatures], nfeatures, H),
        b_in=_pad2(params["b_in"], 1, H),
        w_in_t=None if is_score else _pad2(w_in[nfeatures:nfeatures + 1], 1, H),
        # mid blocks: MXU feeds (bf16 on the fast path).
        w_mid=[_pad2(w, H, H).astype(compute_dtype) for w in params["w_mid"]],
        b_mid=[_pad2(b, 1, H) for b in params["b_mid"]],
        # outblock keeps the true (narrow) output width: no padded output lanes
        # to write back to HBM or slice off afterwards.
        w_out=_pad2(params["w_out"], H, nfeat_out).astype(compute_dtype),
        b_out=_pad2(params["b_out"], 1, nfeat_out),
    )


# ---------------------------------------------------------------------------
# Kernel
# ---------------------------------------------------------------------------
def _make_mlp_kernel(nblocks, nfeatures, has_t, compute_dtype):
    def kernel(*refs):
        idx = 0
        x_ref = refs[idx]; idx += 1
        t_ref = None
        if has_t:
            t_ref = refs[idx]; idx += 1
        w_in_ref = refs[idx]; b_in_ref = refs[idx + 1]; idx += 2
        w_t_ref = None
        if has_t:
            w_t_ref = refs[idx]; idx += 1
        mid_refs = refs[idx:idx + 2 * nblocks]; idx += 2 * nblocks
        w_out_ref = refs[idx]; b_out_ref = refs[idx + 1]; idx += 2
        o_ref = refs[idx]

        # inblock (linear, NO activation, matching the PyTorch forward).
        # K is tiny (nfeatures + 1), so outer-product accumulation on the VPU
        # beats spending an MXU pass on it; everything stays in f32 here.
        x = x_ref[...]                       # (tb, nfeatures) f32
        w_in = w_in_ref[...]                 # (nfeatures, H)  f32
        h = x[:, 0:1] * w_in[0:1, :]
        for k in range(1, nfeatures):
            h = h + x[:, k:k + 1] * w_in[k:k + 1, :]
        if has_t:
            h = h + t_ref[...] * w_t_ref[...]          # fused x||t concat
        h = h + b_in_ref[...]

        # mid blocks: MXU matmul (bf16 feeds on the fast path, f32 accum),
        # bias add + ReLU in f32 on the VPU (works on all chip generations).
        for i in range(nblocks):
            w = mid_refs[2 * i][...]
            b = mid_refs[2 * i + 1][...]
            h = jnp.dot(h.astype(compute_dtype), w,
                        preferred_element_type=jnp.float32) + b
            h = jnp.maximum(h, 0.0)

        # outblock: linear, no activation.  Output width is the true
        # nfeatures (narrow store -> minimal HBM write traffic).
        out = jnp.dot(h.astype(compute_dtype), w_out_ref[...],
                      preferred_element_type=jnp.float32) + b_out_ref[...]
        o_ref[...] = out.astype(o_ref.dtype)

    return kernel


# ---------------------------------------------------------------------------
# Forward wrapper
# ---------------------------------------------------------------------------
def denoise_model_forward(x, t, prep, *, block_rows=None):
    """Pallas implementation of DenoiseModel.forward.

    x: (B, nfeatures) float32
    t: (B, 1) float32, or None (only for an is_score=True model)
    prep: output of prepare_denoise_params().
    """
    x = jnp.asarray(x, jnp.float32)
    has_t = prep.get("w_in_t", None) is not None
    if has_t:
        if t is None:
            raise ValueError("t is required (model was built with is_score=False)")
        t = jnp.asarray(t, jnp.float32)
    elif t is not None:
        # Mirrors the PyTorch module, which would hit a shape error here.
        raise ValueError("t must be None for an is_score=True model")

    B, nfeatures = x.shape
    if nfeatures != prep["w_in_x"].shape[0]:
        raise ValueError("x feature dim does not match prepared params")
    H = prep["w_in_x"].shape[1]
    nfeat_out = prep["w_out"].shape[1]
    nblocks = len(prep["w_mid"])
    compute_dtype = prep["w_mid"][0].dtype if nblocks else prep["w_out"].dtype

    # --- batch tiling -------------------------------------------------------
    if block_rows is not None:
        tb = max(1, min(int(block_rows), B))
    else:
        tb = min(_MAX_TILE_ROWS, B)
    if _num_tensorcores() > 1 and B >= 16:
        # v7x: the "parallel" axis is sharded across 2 TensorCores -> force an
        # even (>= 2) step count so neither core idles on a tail step.
        steps = max(2, pl.cdiv(B, tb))
        if steps % 2:
            steps += 1
        tb = pl.cdiv(B, steps)
    if tb < B:
        tb = min(_round_up(tb, 8), B)
    grid = (pl.cdiv(B, tb),)

    act_map = lambda i: (i, 0)   # activation tiles walk the batch
    rep_map = lambda i: (0, 0)   # weights/biases resident in VMEM

    in_specs = [pl.BlockSpec((tb, nfeatures), act_map)]
    operands = [x]
    if has_t:
        in_specs.append(pl.BlockSpec((tb, 1), act_map))
        operands.append(t)

    def add_resident(a):
        in_specs.append(pl.BlockSpec(a.shape, rep_map))
        operands.append(a)

    add_resident(prep["w_in_x"])
    add_resident(prep["b_in"])
    if has_t:
        add_resident(prep["w_in_t"])
    for w, b in zip(prep["w_mid"], prep["b_mid"]):
        add_resident(w)
        add_resident(b)
    add_resident(prep["w_out"])
    add_resident(prep["b_out"])

    kernel = _make_mlp_kernel(nblocks, nfeatures, has_t, compute_dtype)

    n_act = 2 if has_t else 1
    weight_bytes = sum(int(o.size) * o.dtype.itemsize for o in operands[n_act:])
    act_bytes = sum(int(o.size) * o.dtype.itemsize for o in operands[:n_act])
    flops = 2 * B * (nfeatures * H + nblocks * H * H + H * nfeat_out)
    cost = pl.CostEstimate(flops=flops, transcendentals=0,
                           bytes_accessed=act_bytes + weight_bytes
                           + B * nfeat_out * 4)

    # Rough per-step VMEM footprint: a few live (tb, H) f32 intermediates plus
    # double-buffered operands.  Only raise the scoped limit when needed
    # (v5e default is 16 MiB); stay well under v7x's 64 MiB physical VMEM.
    approx_vmem = 6 * tb * H * 4 + 2 * (weight_bytes + act_bytes // grid[0])
    cp_kwargs = {}
    if approx_vmem > 12 * 1024 * 1024:
        cp_kwargs["vmem_limit_bytes"] = int(
            min(48 * 1024 * 1024, max(2 * approx_vmem, 16 * 1024 * 1024)))
    compiler_params = pltpu.CompilerParams(
        dimension_semantics=("parallel",), **cp_kwargs)

    return pl.pallas_call(
        kernel,
        out_shape=jax.ShapeDtypeStruct((B, nfeat_out), jnp.float32),
        grid=grid,
        in_specs=in_specs,
        out_specs=pl.BlockSpec((tb, nfeat_out), act_map),
        compiler_params=compiler_params,
        cost_estimate=cost,
    )(*operands)


# ---------------------------------------------------------------------------
# Init + pure-JAX reference (mirrors the PyTorch module)
# ---------------------------------------------------------------------------
def init_denoise_params(key, nfeatures, nblocks=2, nunits=64, is_score=False):
    """nn.Linear-style init; weights stored transposed (in, out), bias (1, out)."""
    d_in = nfeatures if is_score else nfeatures + 1

    def linear_init(k, fan_in, fan_out):
        kw, kb = jax.random.split(k)
        bound = 1.0 / jnp.sqrt(jnp.float32(fan_in))
        w = jax.random.uniform(kw, (fan_in, fan_out), jnp.float32,
                               minval=-bound, maxval=bound)
        b = jax.random.uniform(kb, (1, fan_out), jnp.float32,
                               minval=-bound, maxval=bound)
        return w, b

    keys = jax.random.split(key, nblocks + 2)
    w_in, b_in = linear_init(keys[0], d_in, nunits)
    w_mid, b_mid = [], []
    for i in range(nblocks):
        w, b = linear_init(keys[1 + i], nunits, nunits)
        w_mid.append(w)
        b_mid.append(b)
    w_out, b_out = linear_init(keys[-1], nunits, nfeatures)
    return dict(w_in=w_in, b_in=b_in, w_mid=w_mid, b_mid=b_mid,
                w_out=w_out, b_out=b_out)


def denoise_model_reference(x, t, params, *, is_score=False):
    """Pure-JAX f32 reference mirroring the PyTorch forward."""
    if t is None and is_score:
        val = x.astype(jnp.float32)
    else:
        val = jnp.concatenate([x, t], axis=1).astype(jnp.float32)
    val = val @ params["w_in"] + params["b_in"]
    for w, b in zip(params["w_mid"], params["b_mid"]):
        val = jnp.maximum(val @ w + b, 0.0)
    val = val @ params["w_out"] + params["b_out"]
    return val


if __name__ == "__main__":
    # Small shapes consistent with the module: nfeatures=4, nblocks=2,
    # nunits=64, batch=8.
    nfeatures, nblocks, nunits, batch = 4, 2, 64, 8
    is_score = False

    key = jax.random.PRNGKey(0)
    kx, kt, kp = jax.random.split(key, 3)
    x = jax.random.normal(kx, (batch, nfeatures), jnp.float32)
    t = jax.random.uniform(kt, (batch, 1), jnp.float32)

    params = init_denoise_params(kp, nfeatures, nblocks=nblocks,
                                 nunits=nunits, is_score=is_score)
    ref = denoise_model_reference(x, t, params, is_score=is_score)

    # Weight padding / casting done ONCE, outside the jitted forward.
    prep_bf16 = prepare_denoise_params(params, is_score=is_score, use_bf16=True)
    prep_f32 = prepare_denoise_params(params, is_score=is_score, use_bf16=False)

    fwd = jax.jit(denoise_model_forward)

    # Fast path: bf16 MXU feeds, f32 accumulation / bias / ReLU.
    out_bf16 = jax.block_until_ready(fwd(x, t, prep_bf16))
    assert out_bf16.shape == (batch, nfeatures)
    assert jnp.allclose(out_bf16, ref, atol=5e-2, rtol=5e-2)

    # Exactness check: pure-f32 path must match the reference tightly.
    out_f32 = jax.block_until_ready(fwd(x, t, prep_f32))
    assert out_f32.shape == (batch, nfeatures)
    assert jnp.allclose(out_f32, ref, atol=1e-4, rtol=1e-4)

    print("KERNEL_OK")
</pallas_src>

<mosaic_0001>
module attributes {stable_mosaic.version = 11 : i64} {
  func.func @kernel(%arg0: i32, %arg1: memref<8x4xf32, #tpu.memory_space<vmem>>, %arg2: memref<8x1xf32, #tpu.memory_space<vmem>>, %arg3: memref<4x128xf32, #tpu.memory_space<vmem>>, %arg4: memref<1x128xf32, #tpu.memory_space<vmem>>, %arg5: memref<1x128xf32, #tpu.memory_space<vmem>>, %arg6: memref<128x128xbf16, #tpu.memory_space<vmem>>, %arg7: memref<1x128xf32, #tpu.memory_space<vmem>>, %arg8: memref<128x128xbf16, #tpu.memory_space<vmem>>, %arg9: memref<1x128xf32, #tpu.memory_space<vmem>>, %arg10: memref<128x4xbf16, #tpu.memory_space<vmem>>, %arg11: memref<1x4xf32, #tpu.memory_space<vmem>>, %arg12: memref<8x4xf32, #tpu.memory_space<vmem>>) attributes {dimension_semantics = [#tpu.dimension_semantics<parallel>], iteration_bounds = array<i64: 1>, scalar_prefetch = 0 : i64, scratch_operands = 0 : i64, tpu.core_type = #tpu.core_type<tc>, window_params = [{transform_indices = @transform_0, window_bounds = array<i64: 8, 4>}, {transform_indices = @transform_1, window_bounds = array<i64: 8, 1>}, {pipeline_mode = #tpu.pipeline_mode<synchronous>, transform_indices = @transform_2, window_bounds = array<i64: 4, 128>}, {pipeline_mode = #tpu.pipeline_mode<synchronous>, transform_indices = @transform_3, window_bounds = array<i64: 1, 128>}, {pipeline_mode = #tpu.pipeline_mode<synchronous>, transform_indices = @transform_4, window_bounds = array<i64: 1, 128>}, {pipeline_mode = #tpu.pipeline_mode<synchronous>, transform_indices = @transform_5, window_bounds = array<i64: 128, 128>}, {pipeline_mode = #tpu.pipeline_mode<synchronous>, transform_indices = @transform_6, window_bounds = array<i64: 1, 128>}, {pipeline_mode = #tpu.pipeline_mode<synchronous>, transform_indices = @transform_7, window_bounds = array<i64: 128, 128>}, {pipeline_mode = #tpu.pipeline_mode<synchronous>, transform_indices = @transform_8, window_bounds = array<i64: 1, 128>}, {pipeline_mode = #tpu.pipeline_mode<synchronous>, transform_indices = @transform_9, window_bounds = array<i64: 128, 4>}, {pipeline_mode = #tpu.pipeline_mode<synchronous>, transform_indices = @transform_10, window_bounds = array<i64: 1, 4>}, {transform_indices = @transform_11, window_bounds = array<i64: 8, 4>}]} {
    %c0 = arith.constant 0 : index
    %c0_0 = arith.constant 0 : index
    %0 = vector.load %arg1[%c0, %c0_0] : memref<8x4xf32, #tpu.memory_space<vmem>>, vector<8x4xf32>
    %c0_1 = arith.constant 0 : index
    %c0_2 = arith.constant 0 : index
    %1 = vector.load %arg3[%c0_1, %c0_2] : memref<4x128xf32, #tpu.memory_space<vmem>>, vector<4x128xf32>
    %2 = vector.extract_strided_slice %0 {offsets = [0, 0], sizes = [8, 1], strides = [1, 1]} : vector<8x4xf32> to vector<8x1xf32>
    %3 = vector.extract_strided_slice %1 {offsets = [0, 0], sizes = [1, 128], strides = [1, 1]} : vector<4x128xf32> to vector<1x128xf32>
    %4 = vector.broadcast %2 : vector<8x1xf32> to vector<8x128xf32>
    %5 = vector.broadcast %3 : vector<1x128xf32> to vector<8x128xf32>
    %6 = arith.mulf %4, %5 : vector<8x128xf32>
    %7 = vector.extract_strided_slice %0 {offsets = [0, 1], sizes = [8, 1], strides = [1, 1]} : vector<8x4xf32> to vector<8x1xf32>
    %8 = vector.extract_strided_slice %1 {offsets = [1, 0], sizes = [1, 128], strides = [1, 1]} : vector<4x128xf32> to vector<1x128xf32>
    %9 = vector.broadcast %7 : vector<8x1xf32> to vector<8x128xf32>
    %10 = vector.broadcast %8 : vector<1x128xf32> to vector<8x128xf32>
    %11 = arith.mulf %9, %10 : vector<8x128xf32>
    %12 = arith.addf %6, %11 : vector<8x128xf32>
    %13 = vector.extract_strided_slice %0 {offsets = [0, 2], sizes = [8, 1], strides = [1, 1]} : vector<8x4xf32> to vector<8x1xf32>
    %14 = vector.extract_strided_slice %1 {offsets = [2, 0], sizes = [1, 128], strides = [1, 1]} : vector<4x128xf32> to vector<1x128xf32>
    %15 = vector.broadcast %13 : vector<8x1xf32> to vector<8x128xf32>
    %16 = vector.broadcast %14 : vector<1x128xf32> to vector<8x128xf32>
    %17 = arith.mulf %15, %16 : vector<8x128xf32>
    %18 = arith.addf %12, %17 : vector<8x128xf32>
    %19 = vector.extract_strided_slice %0 {offsets = [0, 3], sizes = [8, 1], strides = [1, 1]} : vector<8x4xf32> to vector<8x1xf32>
    %20 = vector.extract_strided_slice %1 {offsets = [3, 0], sizes = [1, 128], strides = [1, 1]} : vector<4x128xf32> to vector<1x128xf32>
    %21 = vector.broadcast %19 : vector<8x1xf32> to vector<8x128xf32>
    %22 = vector.broadcast %20 : vector<1x128xf32> to vector<8x128xf32>
    %23 = arith.mulf %21, %22 : vector<8x128xf32>
    %24 = arith.addf %18, %23 : vector<8x128xf32>
    %c0_3 = arith.constant 0 : index
    %c0_4 = arith.constant 0 : index
    %25 = vector.load %arg2[%c0_3, %c0_4] : memref<8x1xf32, #tpu.memory_space<vmem>>, vector<8x1xf32>
    %c0_5 = arith.constant 0 : index
    %c0_6 = arith.constant 0 : index
    %26 = vector.load %arg5[%c0_5, %c0_6] : memref<1x128xf32, #tpu.memory_space<vmem>>, vector<1x128xf32>
    %27 = vector.broadcast %25 : vector<8x1xf32> to vector<8x128xf32>
    %28 = vector.broadcast %26 : vector<1x128xf32> to vector<8x128xf32>
    %29 = arith.mulf %27, %28 : vector<8x128xf32>
    %30 = arith.addf %24, %29 : vector<8x128xf32>
    %c0_7 = arith.constant 0 : index
    %c0_8 = arith.constant 0 : index
    %31 = vector.load %arg4[%c0_7, %c0_8] : memref<1x128xf32, #tpu.memory_space<vmem>>, vector<1x128xf32>
    %32 = vector.broadcast %31 : vector<1x128xf32> to vector<8x128xf32>
    %33 = arith.addf %30, %32 : vector<8x128xf32>
    %c0_9 = arith.constant 0 : index
    %c0_10 = arith.constant 0 : index
    %34 = vector.load %arg6[%c0_9, %c0_10] : memref<128x128xbf16, #tpu.memory_space<vmem>>, vector<128x128xbf16>
    %c0_11 = arith.constant 0 : index
    %c0_12 = arith.constant 0 : index
    %35 = vector.load %arg7[%c0_11, %c0_12] : memref<1x128xf32, #tpu.memory_space<vmem>>, vector<1x128xf32>
    %36 = arith.truncf %33 : vector<8x128xf32> to vector<8x128xbf16>
    %cst = arith.constant dense<0.000000e+00> : vector<8x128xf32>
    %37 = tpu.matmul %36, %34, %cst {dimension_numbers = #tpu.dot_dimension_numbers<[1], [0], [0], [1], [0, 0, 1, 1], [], []>} : vector<8x128xbf16>, vector<128x128xbf16>, vector<8x128xf32> -> vector<8x128xf32>
    %38 = vector.broadcast %35 : vector<1x128xf32> to vector<8x128xf32>
    %39 = arith.addf %37, %38 : vector<8x128xf32>
    %cst_13 = arith.constant 0.000000e+00 : f32
    %40 = vector.broadcast %cst_13 : f32 to vector<8x128xf32>
    %41 = arith.maximumf %39, %40 : vector<8x128xf32>
    %c0_14 = arith.constant 0 : index
    %c0_15 = arith.constant 0 : index
    %42 = vector.load %arg8[%c0_14, %c0_15] : memref<128x128xbf16, #tpu.memory_space<vmem>>, vector<128x128xbf16>
    %c0_16 = arith.constant 0 : index
    %c0_17 = arith.constant 0 : index
    %43 = vector.load %arg9[%c0_16, %c0_17] : memref<1x128xf32, #tpu.memory_space<vmem>>, vector<1x128xf32>
    %44 = arith.truncf %41 : vector<8x128xf32> to vector<8x128xbf16>
    %cst_18 = arith.constant dense<0.000000e+00> : vector<8x128xf32>
    %45 = tpu.matmul %44, %42, %cst_18 {dimension_numbers = #tpu.dot_dimension_numbers<[1], [0], [0], [1], [0, 0, 1, 1], [], []>} : vector<8x128xbf16>, vector<128x128xbf16>, vector<8x128xf32> -> vector<8x128xf32>
    %46 = vector.broadcast %43 : vector<1x128xf32> to vector<8x128xf32>
    %47 = arith.addf %45, %46 : vector<8x128xf32>
    %cst_19 = arith.constant 0.000000e+00 : f32
    %48 = vector.broadcast %cst_19 : f32 to vector<8x128xf32>
    %49 = arith.maximumf %47, %48 : vector<8x128xf32>
    %50 = arith.truncf %49 : vector<8x128xf32> to vector<8x128xbf16>
    %c0_20 = arith.constant 0 : index
    %c0_21 = arith.constant 0 : index
    %51 = vector.load %arg10[%c0_20, %c0_21] : memref<128x4xbf16, #tpu.memory_space<vmem>>, vector<128x4xbf16>
    %cst_22 = arith.constant dense<0.000000e+00> : vector<8x4xf32>
    %52 = tpu.matmul %50, %51, %cst_22 {dimension_numbers = #tpu.dot_dimension_numbers<[1], [0], [0], [1], [0, 0, 1, 1], [], []>} : vector<8x128xbf16>, vector<128x4xbf16>, vector<8x4xf32> -> vector<8x4xf32>
    %c0_23 = arith.constant 0 : index
    %c0_24 = arith.constant 0 : index
    %53 = vector.load %arg11[%c0_23, %c0_24] : memref<1x4xf32, #tpu.memory_space<vmem>>, vector<1x4xf32>
    %54 = vector.broadcast %53 : vector<1x4xf32> to vector<8x4xf32>
    %55 = arith.addf %52, %54 : vector<8x4xf32>
    %c0_25 = arith.constant 0 : index
    %c0_26 = arith.constant 0 : index
    %56 = vector.load %arg12[%c0_25, %c0_26] : memref<8x4xf32, #tpu.memory_space<vmem>>, vector<8x4xf32>
    tpu.vector_store %arg12[%c0_25, %c0_26], %55 {strides = array<i32>} : memref<8x4xf32, #tpu.memory_space<vmem>>, vector<8x4xf32>,
    return
  }
  func.func @transform_0(%arg0: i32) -> (i32, i32) {
    %c0_i32 = arith.constant 0 : i32
    %c0_i32_0 = arith.constant 0 : i32
    return %arg0, %c0_i32 : i32, i32
  }
  func.func @transform_1(%arg0: i32) -> (i32, i32) {
    %c0_i32 = arith.constant 0 : i32
    %c0_i32_0 = arith.constant 0 : i32
    return %arg0, %c0_i32 : i32, i32
  }
  func.func @transform_2(%arg0: i32) -> (i32, i32) {
    %c0_i32 = arith.constant 0 : i32
    %c0_i32_0 = arith.constant 0 : i32
    %c0_i32_1 = arith.constant 0 : i32
    return %c0_i32, %c0_i32_0 : i32, i32
  }
  func.func @transform_3(%arg0: i32) -> (i32, i32) {
    %c0_i32 = arith.constant 0 : i32
    %c0_i32_0 = arith.constant 0 : i32
    %c0_i32_1 = arith.constant 0 : i32
    return %c0_i32, %c0_i32_0 : i32, i32
  }
  func.func @transform_4(%arg0: i32) -> (i32, i32) {
    %c0_i32 = arith.constant 0 : i32
    %c0_i32_0 = arith.constant 0 : i32
    %c0_i32_1 = arith.constant 0 : i32
    return %c0_i32, %c0_i32_0 : i32, i32
  }
  func.func @transform_5(%arg0: i32) -> (i32, i32) {
    %c0_i32 = arith.constant 0 : i32
    %c0_i32_0 = arith.constant 0 : i32
    %c0_i32_1 = arith.constant 0 : i32
    return %c0_i32, %c0_i32_0 : i32, i32
  }
  func.func @transform_6(%arg0: i32) -> (i32, i32) {
    %c0_i32 = arith.constant 0 : i32
    %c0_i32_0 = arith.constant 0 : i32
    %c0_i32_1 = arith.constant 0 : i32
    return %c0_i32, %c0_i32_0 : i32, i32
  }
  func.func @transform_7(%arg0: i32) -> (i32, i32) {
    %c0_i32 = arith.constant 0 : i32
    %c0_i32_0 = arith.constant 0 : i32
    %c0_i32_1 = arith.constant 0 : i32
    return %c0_i32, %c0_i32_0 : i32, i32
  }
  func.func @transform_8(%arg0: i32) -> (i32, i32) {
    %c0_i32 = arith.constant 0 : i32
    %c0_i32_0 = arith.constant 0 : i32
    %c0_i32_1 = arith.constant 0 : i32
    return %c0_i32, %c0_i32_0 : i32, i32
  }
  func.func @transform_9(%arg0: i32) -> (i32, i32) {
    %c0_i32 = arith.constant 0 : i32
    %c0_i32_0 = arith.constant 0 : i32
    %c0_i32_1 = arith.constant 0 : i32
    return %c0_i32, %c0_i32_0 : i32, i32
  }
  func.func @transform_10(%arg0: i32) -> (i32, i32) {
    %c0_i32 = arith.constant 0 : i32
    %c0_i32_0 = arith.constant 0 : i32
    %c0_i32_1 = arith.constant 0 : i32
    return %c0_i32, %c0_i32_0 : i32, i32
  }
  func.func @transform_11(%arg0: i32) -> (i32, i32) {
    %c0_i32 = arith.constant 0 : i32
    %c0_i32_0 = arith.constant 0 : i32
    return %arg0, %c0_i32 : i32, i32
  }
}

</mosaic_0001>

<llo_original>
// kernel: denoise_model_forward.1
$region0: #{denoise_model_forward.1}
  #allocation0 [shape = 'u32[]', space=smem, size = 0x4, offset = 0x4, fixed_abs, tag = 'smem constant byte address 0x4 - core index']
  #allocation1 [shape = 'u32[72,128]{1,0:T(1,128)}', space=vmem, size = 0x9000, scoped, tag = 'internal scratch']
  %s0 = inlined_call_operand.vmem [shape: f32[8,4], index: 0, kind: input, shape index: {}]
  %s1 = inlined_call_operand.vmem [shape: f32[8,1], index: 1, kind: input, shape index: {}]
  %s2 = inlined_call_operand.vmem [shape: f32[4,128], index: 2, kind: input, shape index: {}]
  %s3 = inlined_call_operand.vmem [shape: f32[1,128], index: 3, kind: input, shape index: {}]
  %s4 = inlined_call_operand.vmem [shape: f32[1,128], index: 4, kind: input, shape index: {}]
  %s5 = inlined_call_operand.vmem [shape: bf16[128,128], index: 5, kind: input, shape index: {}]
  %s6 = inlined_call_operand.vmem [shape: f32[1,128], index: 6, kind: input, shape index: {}]
  %s7 = inlined_call_operand.hbm [shape: bf16[128,128], index: 7, kind: input, shape index: {}]
  %s8 = inlined_call_operand.vmem [shape: f32[1,128], index: 8, kind: input, shape index: {}]
  %s9 = inlined_call_operand.vmem [shape: bf16[128,4], index: 9, kind: input, shape index: {}]
  %s10 = inlined_call_operand.vmem [shape: f32[1,4], index: 10, kind: input, shape index: {}]
  %s11 = inlined_call_operand.vmem [shape: f32[8,4], index: 11, kind: output, shape index: {}]
  %s12 = sld [smem:[#allocation0]]
  $region58: #{denoise_model_forward.1} parent=0
    _
  %s14 = ssub.s32 1, %s12
  %s15 = scalar_select 0, %s14, %s12
  $region1: #{denoise_model_forward.1} parent=0
    #allocation2 [shape = 'u8[32768]{0}', space=vmem, size = 0x8000, scoped, tag = 'input window, operand 7, single buffered']
    #allocation3 [shape = 's32[1]{0}', space=sflag, size = 0x4, scoped, tag = 'scoped memory for denoise_model_forward.1']
    %16 = vsyncpa [#allocation3], 0
    // Predicated region
    $region2: #{denoise_model_forward.1} parent=1 // pred_check
      _
    $region3: #{denoise_model_forward.1} parent=1 // pred_check_branch
      %18 = sbr.rel (0) target = $region5
    $region4: #{denoise_model_forward.1} parent=1 // pred_region
      _
    $region5: #{denoise_model_forward.1} parent=1 // pred_fallthru
      _
    // Predicated region
    $region6: #{denoise_model_forward.1} parent=1 // pred_check
      _
    $region7: #{denoise_model_forward.1} parent=1 // pred_check_branch
      %20 = sbr.rel (0) target = $region9
    $region8: #{denoise_model_forward.1} parent=1 // pred_region
      _
    $region9: #{denoise_model_forward.1} parent=1 // pred_fallthru
      _
    // Predicated region
    $region10: #{denoise_model_forward.1} parent=1 // pred_check
      _
    $region11: #{denoise_model_forward.1} parent=1 // pred_check_branch
      %22 = sbr.rel (0) target = $region13
    $region12: #{denoise_model_forward.1} parent=1 // pred_region
      _
    $region13: #{denoise_model_forward.1} parent=1 // pred_fallthru
      _
    // Predicated region
    $region14: #{denoise_model_forward.1} parent=1 // pred_check
      _
    $region15: #{denoise_model_forward.1} parent=1 // pred_check_branch
      %24 = sbr.rel (0) target = $region17
    $region16: #{denoise_model_forward.1} parent=1 // pred_region
      _
    $region17: #{denoise_model_forward.1} parent=1 // pred_fallthru
      _
    // Predicated region
    $region18: #{denoise_model_forward.1} parent=1 // pred_check
      _
    $region19: #{denoise_model_forward.1} parent=1 // pred_check_branch
      %26 = sbr.rel (0) target = $region21
    $region20: #{denoise_model_forward.1} parent=1 // pred_region
      _
    $region21: #{denoise_model_forward.1} parent=1 // pred_fallthru
      _
    // Predicated region
    $region22: #{denoise_model_forward.1} parent=1 // pred_check
      _
    $region23: #{denoise_model_forward.1} parent=1 // pred_check_branch
      %28 = sbr.rel (0) target = $region25
    $region24: #{denoise_model_forward.1} parent=1 // pred_region
      _
    $region25: #{denoise_model_forward.1} parent=1 // pred_fallthru
      _
    // Predicated region
    $region26: #{denoise_model_forward.1} parent=1 // pred_check
      _
    $region27: #{denoise_model_forward.1} parent=1 // pred_check_branch
      %30 = sbr.rel (0) target = $region29
    $region28: #{denoise_model_forward.1} parent=1 // pred_region
      _
    $region29: #{denoise_model_forward.1} parent=1 // pred_fallthru
      _
    // Predicated region
    $region30: #{denoise_model_forward.1} parent=1 // pred_check
      _
    $region31: #{denoise_model_forward.1} parent=1 // pred_check_branch
      %32 = sbr.rel (0) target = $region33
    $region32: #{denoise_model_forward.1} parent=1 // pred_region
      %34 = vsyncadd [#allocation3], 0
      %s35 = sshll.u32 %s7, 4
      %s36 = int_to_ptr.hbm [resolvable:$true] %s35
      %s37 = sshll.u32 [#allocation2], 4
      %s38 = int_to_ptr.vmem [resolvable:$true] %s37
      %43 = dma.hbm_to_vmem [thread:$0]  %s36, 1024, %s38, [#allocation3], 64, 64, 4
    $region33: #{denoise_model_forward.1} parent=1 // pred_fallthru
      _
    // Predicated region
    $region34: #{denoise_model_forward.1} parent=1 // pred_check
      _
    $region35: #{denoise_model_forward.1} parent=1 // pred_check_branch
      %45 = sbr.rel (0) target = $region37
    $region36: #{denoise_model_forward.1} parent=1 // pred_region
      _
    $region37: #{denoise_model_forward.1} parent=1 // pred_fallthru
      _
    // Predicated region
    $region38: #{denoise_model_forward.1} parent=1 // pred_check
      _
    $region39: #{denoise_model_forward.1} parent=1 // pred_check_branch
      %47 = sbr.rel (0) target = $region41
    $region40: #{denoise_model_forward.1} parent=1 // pred_region
      _
    $region41: #{denoise_model_forward.1} parent=1 // pred_fallthru
      _
    // Predicated region
    $region42: #{denoise_model_forward.1} parent=1 // pred_check
      _
    $region43: #{denoise_model_forward.1} parent=1 // pred_check_branch
      %49 = sbr.rel (0) target = $region45
    $region44: #{denoise_model_forward.1} parent=1 // pred_region
      _
    $region45: #{denoise_model_forward.1} parent=1 // pred_fallthru
      _
    // Predicated region
    $region46: #{denoise_model_forward.1} parent=1 // pred_check
      _
    $region47: #{denoise_model_forward.1} parent=1 // pred_check_branch
      %51 = sbr.rel (0) target = $region49
    $region48: #{denoise_model_forward.1} parent=1 // pred_region
      %53 = dma.done [#allocation3], 1024
    $region49: #{denoise_model_forward.1} parent=1 // pred_fallthru
      _
    %v54 = vld [vmem:[%s0] sm:$0xff]
    %v55 = vld [vmem:[%s2] sm:$0xf]
    %57 = vset.pattern.permute.xlu0 0
    %58 = vperm.xlu0 %57, %v54
    %v59 = vpop.permute.xlu0 %58
    %v61 = vperm.slane %v55, 0
    %v62 = vmul.f32 %v59, %v61
    %63 = vset.pattern.permute.xlu0 1
    %64 = vperm.xlu0 %63, %v54
    %v65 = vpop.permute.xlu0 %64
    %v67 = vperm.slane %v55, 1
    %v68 = vmul.f32 %v65, %v67
    %v69 = vadd.f32 %v62, %v68
    %70 = vset.pattern.permute.xlu0 2
    %71 = vperm.xlu0 %70, %v54
    %v72 = vpop.permute.xlu0 %71
    %v74 = vperm.slane %v55, 2
    %v75 = vmul.f32 %v72, %v74
    %v76 = vadd.f32 %v69, %v75
    %77 = vset.pattern.permute.xlu0 3
    %78 = vperm.xlu0 %77, %v54
    %v79 = vpop.permute.xlu0 %78
    %v81 = vperm.slane %v55, 3
    %v82 = vmul.f32 %v79, %v81
    %v83 = vadd.f32 %v76, %v82
    %v84 = vld [vmem:[%s1] sm:$0xff]
    %v85 = vld [vmem:[%s4] sm:$0x1]
    %87 = vset.pattern.permute.xlu0 0
    %88 = vperm.xlu0 %87, %v84
    %v89 = vpop.permute.xlu0 %88
    %v92 = vperm.slane %v85, 0
    %v94 = vmul.f32 %v89, %v92
    %v95 = vadd.f32 %v83, %v94
    %v96 = vld [vmem:[%s3] sm:$0x1]
    %v98 = vperm.slane %v96, 0
    %v100 = vadd.f32 %v95, %v98
    %v101 = vld [vmem:[%s5] sm:$0xf]
    %v102 = vld [vmem:[%s5 + $0x4] sm:$0xf]
    %v103 = vld [vmem:[%s5 + $0x8] sm:$0xf]
    %v104 = vld [vmem:[%s5 + $0xc] sm:$0xf]
    %v105 = vld [vmem:[%s5 + $0x10] sm:$0xf]
    %v106 = vld [vmem:[%s5 + $0x14] sm:$0xf]
    %v107 = vld [vmem:[%s5 + $0x18] sm:$0xf]
    %v108 = vld [vmem:[%s5 + $0x1c] sm:$0xf]
    %v109 = vld [vmem:[%s5 + $0x20] sm:$0xf]
    %v110 = vld [vmem:[%s5 + $0x24] sm:$0xf]
    %v111 = vld [vmem:[%s5 + $0x28] sm:$0xf]
    %v112 = vld [vmem:[%s5 + $0x2c] sm:$0xf]
    %v113 = vld [vmem:[%s5 + $0x30] sm:$0xf]
    %v114 = vld [vmem:[%s5 + $0x34] sm:$0xf]
    %v115 = vld [vmem:[%s5 + $0x38] sm:$0xf]
    %v116 = vld [vmem:[%s5 + $0x3c] sm:$0xf]
    %v117 = vld [vmem:[%s6] sm:$0x1]
    %v118 = vpack.c.bf16 %v100, %v100
    %v120 = vperm.slane %v117, 0
    %v138 = vunpack.c.l.b16 %v101
    %v139 = vunpack.c.l.b16 %v102
    %v140 = vunpack.c.l.b16 %v103
    %v141 = vunpack.c.l.b16 %v104
    %v142 = vunpack.c.l.b16 %v105
    %v143 = vunpack.c.l.b16 %v106
    %v144 = vunpack.c.l.b16 %v107
    %v145 = vunpack.c.l.b16 %v108
    %v146 = vunpack.c.l.b16 %v109
    %v147 = vunpack.c.l.b16 %v110
    %v148 = vunpack.c.l.b16 %v111
    %v149 = vunpack.c.l.b16 %v112
    %v150 = vunpack.c.l.b16 %v113
    %v151 = vunpack.c.l.b16 %v114
    %v152 = vunpack.c.l.b16 %v115
    %v153 = vunpack.c.l.b16 %v116
    %v154 = vpack.c.b16 %v139, %v138
    %v155 = vpack.c.b16 %v141, %v140
    %v156 = vpack.c.b16 %v143, %v142
    %v157 = vpack.c.b16 %v145, %v144
    %v158 = vpack.c.b16 %v147, %v146
    %v159 = vpack.c.b16 %v149, %v148
    %v160 = vpack.c.b16 %v151, %v150
    %v161 = vpack.c.b16 %v153, %v152
    %170 = vmatpush.bf16.msra.mxu0 %v161
    %171 = vmatpush.bf16.msra.mxu0 %v160
    %172 = vmatpush.bf16.msra.mxu0 %v159
    %173 = vmatpush.bf16.msra.mxu0 %v158
    %174 = vmatpush.bf16.msra.mxu0 %v157
    %175 = vmatpush.bf16.msra.mxu0 %v156
    %176 = vmatpush.bf16.msra.mxu0 %v155
    %177 = vmatpush.bf16.msra.mxu0 %v154
    %178 = vmatmul.bf16.gmra.mxu0 %v118
    %v179 = vpop.f32.mrf.mxu0
    %v180 = vadd.f32 %v120, %v179
    %v181 = vpop.f32.mrf.mxu0
    %182 = vdwg.mxu0
    %v183 = vmax.f32 %v180, 0.0
    %v184 = vld [vmem:[#allocation2] sm:$0xf]
    %v185 = vld [vmem:[#allocation2 + $0x4] sm:$0xf]
    %v186 = vld [vmem:[#allocation2 + $0x8] sm:$0xf]
    %v187 = vld [vmem:[#allocation2 + $0xc] sm:$0xf]
    %v188 = vld [vmem:[#allocation2 + $0x10] sm:$0xf]
    %v189 = vld [vmem:[#allocation2 + $0x14] sm:$0xf]
    %v190 = vld [vmem:[#allocation2 + $0x18] sm:$0xf]
    %v191 = vld [vmem:[#allocation2 + $0x1c] sm:$0xf]
    %v192 = vld [vmem:[#allocation2 + $0x20] sm:$0xf]
    %v193 = vld [vmem:[#allocation2 + $0x24] sm:$0xf]
    %v194 = vld [vmem:[#allocation2 + $0x28] sm:$0xf]
    %v195 = vld [vmem:[#allocation2 + $0x2c] sm:$0xf]
    %v196 = vld [vmem:[#allocation2 + $0x30] sm:$0xf]
    %v197 = vld [vmem:[#allocation2 + $0x34] sm:$0xf]
    %v198 = vld [vmem:[#allocation2 + $0x38] sm:$0xf]
    %v199 = vld [vmem:[#allocation2 + $0x3c] sm:$0xf]
    %v200 = vld [vmem:[%s8] sm:$0x1]
    %v201 = vpack.c.bf16 %v183, %v183
    %v203 = vperm.slane %v200, 0
    %v221 = vunpack.c.l.b16 %v184
    %v222 = vunpack.c.l.b16 %v185
    %v223 = vunpack.c.l.b16 %v186
    %v224 = vunpack.c.l.b16 %v187
    %v225 = vunpack.c.l.b16 %v188
    %v226 = vunpack.c.l.b16 %v189
    %v227 = vunpack.c.l.b16 %v190
    %v228 = vunpack.c.l.b16 %v191
    %v229 = vunpack.c.l.b16 %v192
    %v230 = vunpack.c.l.b16 %v193
    %v231 = vunpack.c.l.b16 %v194
    %v232 = vunpack.c.l.b16 %v195
    %v233 = vunpack.c.l.b16 %v196
    %v234 = vunpack.c.l.b16 %v197
    %v235 = vunpack.c.l.b16 %v198
    %v236 = vunpack.c.l.b16 %v199
    %v237 = vpack.c.b16 %v222, %v221
    %v238 = vpack.c.b16 %v224, %v223
    %v239 = vpack.c.b16 %v226, %v225
    %v240 = vpack.c.b16 %v228, %v227
    %v241 = vpack.c.b16 %v230, %v229
    %v242 = vpack.c.b16 %v232, %v231
    %v243 = vpack.c.b16 %v234, %v233
    %v244 = vpack.c.b16 %v236, %v235
    %253 = vmatpush.bf16.msra.mxu0 %v244
    %254 = vmatpush.bf16.msra.mxu0 %v243
    %255 = vmatpush.bf16.msra.mxu0 %v242
    %256 = vmatpush.bf16.msra.mxu0 %v241
    %257 = vmatpush.bf16.msra.mxu0 %v240
    %258 = vmatpush.bf16.msra.mxu0 %v239
    %259 = vmatpush.bf16.msra.mxu0 %v238
    %260 = vmatpush.bf16.msra.mxu0 %v237
    %261 = vmatmul.bf16.gmra.mxu0 %v201
    %v262 = vpop.f32.mrf.mxu0
    %v263 = vadd.f32 %v203, %v262
    %v264 = vpop.f32.mrf.mxu0
    %265 = vdwg.mxu0
    %v266 = vmax.f32 %v263, 0.0
    %v267 = vpack.c.bf16 %v266, %v266
    %v268 = vld [vmem:[%s9] sm:$0xf]
    %v269 = vld [vmem:[%s9 + $0x4] sm:$0xf]
    %v270 = vld [vmem:[%s9 + $0x8] sm:$0xf]
    %v271 = vld [vmem:[%s9 + $0xc] sm:$0xf]
    %v272 = vld [vmem:[%s9 + $0x10] sm:$0xf]
    %v273 = vld [vmem:[%s9 + $0x14] sm:$0xf]
    %v274 = vld [vmem:[%s9 + $0x18] sm:$0xf]
    %v275 = vld [vmem:[%s9 + $0x1c] sm:$0xf]
    %v276 = vld [vmem:[%s9 + $0x20] sm:$0xf]
    %v277 = vld [vmem:[%s9 + $0x24] sm:$0xf]
    %v278 = vld [vmem:[%s9 + $0x28] sm:$0xf]
    %v279 = vld [vmem:[%s9 + $0x2c] sm:$0xf]
    %v280 = vld [vmem:[%s9 + $0x30] sm:$0xf]
    %v281 = vld [vmem:[%s9 + $0x34] sm:$0xf]
    %v282 = vld [vmem:[%s9 + $0x38] sm:$0xf]
    %v283 = vld [vmem:[%s9 + $0x3c] sm:$0xf]
    %v284 = vld [vmem:[%s10] sm:$0x1]
    %v286 = vperm.slane %v284, 0
    %v304 = vunpack.c.l.b16 %v268
    %v305 = vunpack.c.l.b16 %v269
    %v306 = vunpack.c.l.b16 %v270
    %v307 = vunpack.c.l.b16 %v271
    %v308 = vunpack.c.l.b16 %v272
    %v309 = vunpack.c.l.b16 %v273
    %v310 = vunpack.c.l.b16 %v274
    %v311 = vunpack.c.l.b16 %v275
    %v312 = vunpack.c.l.b16 %v276
    %v313 = vunpack.c.l.b16 %v277
    %v314 = vunpack.c.l.b16 %v278
    %v315 = vunpack.c.l.b16 %v279
    %v316 = vunpack.c.l.b16 %v280
    %v317 = vunpack.c.l.b16 %v281
    %v318 = vunpack.c.l.b16 %v282
    %v319 = vunpack.c.l.b16 %v283
    %v320 = vpack.c.b16 %v305, %v304
    %v321 = vpack.c.b16 %v307, %v306
    %v322 = vpack.c.b16 %v309, %v308
    %v323 = vpack.c.b16 %v311, %v310
    %v324 = vpack.c.b16 %v313, %v312
    %v325 = vpack.c.b16 %v315, %v314
    %v326 = vpack.c.b16 %v317, %v316
    %v327 = vpack.c.b16 %v319, %v318
    %336 = vmatpush.bf16.msra.mxu0 %v327
    %337 = vmatpush.bf16.msra.mxu0 %v326
    %338 = vmatpush.bf16.msra.mxu0 %v325
    %339 = vmatpush.bf16.msra.mxu0 %v324
    %340 = vmatpush.bf16.msra.mxu0 %v323
    %341 = vmatpush.bf16.msra.mxu0 %v322
    %342 = vmatpush.bf16.msra.mxu0 %v321
    %343 = vmatpush.bf16.msra.mxu0 %v320
    %344 = vmatmul.bf16.gmra.mxu0 %v267
    %v345 = vpop.f32.mrf.mxu0
    %v346 = vadd.f32 %v286, %v345
    %v347 = vpop.f32.mrf.mxu0
    %348 = vdwg.mxu0
    %vm349 = vcmask 31744
    %350 = vst.msk [vmem:[%s11] sm:$0xff] %vm349, %v346
    // Predicated region
    $region50: #{denoise_model_forward.1} parent=1 // pred_check
      _
    $region51: #{denoise_model_forward.1} parent=1 // pred_check_branch
      %352 = sbr.rel (0) target = $region53
    $region52: #{denoise_model_forward.1} parent=1 // pred_region
      _
    $region53: #{denoise_model_forward.1} parent=1 // pred_fallthru
      _
    // Predicated region
    $region54: #{denoise_model_forward.1} parent=1 // pred_check
      _
    $region55: #{denoise_model_forward.1} parent=1 // pred_check_branch
      %354 = sbr.rel (0) target = $region57
    $region56: #{denoise_model_forward.1} parent=1 // pred_region
      _
    $region57: #{denoise_model_forward.1} parent=1 // pred_fallthru
      _
    %355 = vsyncpa [#allocation3], 1

</llo_original>
